<compile_context>
chip_gen: v5e
topology: v5e:2x2
jax: 0.10.0
libtpu: 0.0.40
codegen_flags: <defaults>
</compile_context>

<pallas_src>
import functools

import jax
import jax.numpy as jnp
from jax.experimental import pallas as pl
from jax.experimental.pallas import tpu as pltpu

_MIB = 1024 * 1024


def _round_up(n, m):
    return ((n + m - 1) // m) * m


def _cdiv(a, b):
    return -(-a // b)


def _tpu_vmem_capacity_bytes():
    """Physical VMEM per TensorCore; conservative 64 MiB if the query is unavailable."""
    try:
        info = pltpu.get_tpu_info()
        cap = getattr(info, "vmem_capacity_bytes", None)
        if cap:
            return int(cap)
    except Exception:
        pass
    return 64 * _MIB


def _pick_tile_f(d_ff, requested):
    """Largest 256- (then 128-) aligned divisor of d_ff that is <= requested.
    If d_ff is not a multiple of 128, return a 128-aligned width and let the caller use
    ragged chunks + in-kernel masking.  Never returns full d_ff for large d_ff."""
    if d_ff <= 128:
        return d_ff
    requested = max(128, min(requested, d_ff))
    for align in (256, 128):
        t = (requested // align) * align
        while t >= align:
            if d_ff % t == 0:
                return t
            t -= align
    # d_ff not a multiple of 128: ragged last chunk (masked inside the kernel).
    return (requested // 128) * 128


def _pick_tile_m(M, requested, sub):
    if M <= requested:
        return M                              # single row tile == full dim (always legal)
    if requested >= 256:
        tm = (requested // 256) * 256         # full MXU tiles on v6e/v7x
    else:
        tm = (requested // sub) * sub
    return max(sub, tm)


def _vmem_bytes(tile_m, tile_f, d_model, w_itemsize, x_itemsize, o_itemsize):
    return (2 * tile_m * d_model * x_itemsize        # x tile (double buffered)
            + 2 * d_model * tile_f * w_itemsize      # W1 chunk
            + 2 * tile_f * w_itemsize                # b1 chunk
            + 2 * tile_f * d_model * w_itemsize      # W2 chunk
            + 2 * d_model * w_itemsize               # b2
            + 2 * tile_m * d_model * o_itemsize      # output tile
            + tile_m * d_model * 4)                  # f32 accumulator scratch


def ffn_kernel(x_ref, w1_ref, b1_ref, w2_ref, b2_ref, o_ref, acc_ref,
               *, d_ff, tile_f, ragged_f):
    # x_ref:  (tile_m, d_model)
    # w1_ref: (d_model, tile_f), b1_ref: (1, tile_f)
    # w2_ref: (tile_f, d_model), b2_ref: (1, d_model)
    # acc_ref: (tile_m, d_model) f32, resident across the d_ff reduction axis.
    k = pl.program_id(1)

    @pl.when(k == 0)
    def _():
        acc_ref[...] = jnp.zeros_like(acc_ref)

    h = jnp.dot(x_ref[...], w1_ref[...], preferred_element_type=jnp.float32)
    h = jnp.maximum(h + b1_ref[...].astype(jnp.float32), 0.0)        # bias + ReLU in f32
    w2 = w2_ref[...]

    if ragged_f:
        # Last d_ff chunk is ragged: zero the out-of-range h columns and W2 rows so
        # stale pad contents (possibly NaN/Inf) can't contaminate the accumulator.
        rem = d_ff - k * tile_f                                       # == tile_f except last
        col = jax.lax.broadcasted_iota(jnp.int32, h.shape, 1)
        row = jax.lax.broadcasted_iota(jnp.int32, w2.shape, 0)
        h = jnp.where(col < rem, h, 0.0)
        w2 = jnp.where(row < rem, w2, jnp.zeros_like(w2))

    acc_ref[...] += jnp.dot(h.astype(w2.dtype), w2, preferred_element_type=jnp.float32)

    @pl.when(k == pl.num_programs(1) - 1)
    def _():
        o_ref[...] = (acc_ref[...] + b2_ref[...].astype(jnp.float32)).astype(o_ref.dtype)


def feed_forward(x, w1, b1, w2, b2, *, tile_m=None, tile_f=512, vmem_limit_bytes=None):
    """x: (B, S, d_model) -> (B, S, d_model). Fused Linear->ReLU->Linear (eval-mode dropout).

    For peak MXU throughput on v6e/v7x pass x / w1 / w2 as bf16; bias, ReLU and the
    accumulator stay in f32 inside the kernel.
    """
    B, S, d_model = x.shape
    d_ff = w1.shape[1]
    M = B * S

    # ---- generation-aware defaults -------------------------------------------------
    vmem_cap = _tpu_vmem_capacity_bytes()
    small_vmem = vmem_cap < 100 * _MIB                 # v7x-class: 64 MiB/TC, 2 TCs/chip
    if vmem_limit_bytes is None:
        vmem_limit_bytes = min(96 * _MIB, max(32 * _MIB, vmem_cap - 12 * _MIB))
    if tile_m is None:
        tile_m = 512 if small_vmem else 1024

    sub = 8 if x.dtype.itemsize >= 4 else 16           # sublane granularity

    tile_f = _pick_tile_f(d_ff, tile_f)
    ragged_f = (d_ff % tile_f) != 0
    tile_m = _pick_tile_m(M, tile_m, sub)

    # Fit inside the scoped-VMEM budget (shrink tile_m first, then tile_f).
    budget = int(vmem_limit_bytes * 0.9)
    while _vmem_bytes(tile_m, tile_f, d_model, w1.dtype.itemsize,
                      x.dtype.itemsize, x.dtype.itemsize) > budget:
        if tile_m > 256:
            tile_m -= 256
        elif tile_m > sub:
            tile_m = max(sub, _round_up(tile_m // 2, sub))
        elif tile_f > 128 and d_ff % (tile_f // 2) == 0:
            tile_f //= 2
        else:
            break

    # v7x megacore: make sure the 'parallel' row axis has >= 2 tiles when possible.
    if small_vmem and _cdiv(M, tile_m) < 2 and M >= 2 * sub:
        tile_m = _pick_tile_m(M, _round_up(_cdiv(M, 2), sub), sub)

    n_rows = _cdiv(M, tile_m)
    n_k = _cdiv(d_ff, tile_f)

    x2 = x.reshape(M, d_model)                         # no padding: ragged boundary blocks
    b1_2 = b1.reshape(1, d_ff)
    b2_2 = b2.reshape(1, d_model)

    flops = int(4 * M * d_model * d_ff)
    bytes_accessed = int(2 * M * d_model * x.dtype.itemsize
                         + n_rows * (2 * d_model * d_ff + d_ff + d_model)
                         * w1.dtype.itemsize)

    kernel = functools.partial(ffn_kernel, d_ff=d_ff, tile_f=tile_f, ragged_f=ragged_f)

    out2 = pl.pallas_call(
        kernel,
        out_shape=jax.ShapeDtypeStruct((M, d_model), x.dtype),
        grid_spec=pltpu.PrefetchScalarGridSpec(
            num_scalar_prefetch=0,
            grid=(n_rows, n_k),                                        # (rows, d_ff reduction)
            in_specs=[
                pl.BlockSpec((tile_m, d_model), lambda i, k: (i, 0)),  # x row tile
                pl.BlockSpec((d_model, tile_f), lambda i, k: (0, k)),  # W1[:, k]
                pl.BlockSpec((1, tile_f),       lambda i, k: (0, k)),  # b1[k]
                pl.BlockSpec((tile_f, d_model), lambda i, k: (k, 0)),  # W2[k, :]
                pl.BlockSpec((1, d_model),      lambda i, k: (0, 0)),  # b2
            ],
            out_specs=pl.BlockSpec((tile_m, d_model), lambda i, k: (i, 0)),
            scratch_shapes=[pltpu.VMEM((tile_m, d_model), jnp.float32)],
        ),
        compiler_params=pltpu.CompilerParams(
            dimension_semantics=("parallel", "arbitrary"),
            vmem_limit_bytes=int(vmem_limit_bytes)),
        cost_estimate=pl.CostEstimate(flops=flops, transcendentals=0,
                                      bytes_accessed=bytes_accessed),
    )(x2, w1, b1_2, w2, b2_2)

    return out2.reshape(B, S, d_model)


def init_params(key, d_model, d_ff, dtype=jnp.float32):
    """Deterministic PyTorch-Linear-style init (uniform +/- 1/sqrt(fan_in))."""
    k1, k2, k3, k4 = jax.random.split(key, 4)
    lim1 = 1.0 / (d_model ** 0.5)
    lim2 = 1.0 / (d_ff ** 0.5)
    w1 = jax.random.uniform(k1, (d_model, d_ff), dtype, -lim1, lim1)
    b1 = jax.random.uniform(k2, (d_ff,), dtype, -lim1, lim1)
    w2 = jax.random.uniform(k3, (d_ff, d_model), dtype, -lim2, lim2)
    b2 = jax.random.uniform(k4, (d_model,), dtype, -lim2, lim2)
    return w1, b1, w2, b2


if __name__ == "__main__":
    key = jax.random.PRNGKey(0)
    kx, kp, kx2, kp2 = jax.random.split(key, 4)

    # Case 1: f32, lane-dense d_model=128, d_ff=256 split into 2 reduction chunks,
    # ragged token count (B*S = 10) exercising the no-pad boundary-block path.
    B, S, d_model, d_ff = 2, 5, 128, 256
    x = jax.random.normal(kx, (B, S, d_model), jnp.float32)
    w1, b1, w2, b2 = init_params(kp, d_model, d_ff)
    out = jax.block_until_ready(feed_forward(x, w1, b1, w2, b2, tile_f=128))
    ref = jnp.maximum(x @ w1 + b1, 0.0) @ w2 + b2
    assert out.shape == (B, S, d_model)
    assert jnp.allclose(out, ref, atol=1e-4, rtol=1e-4), "f32 mismatch vs reference"

    # Case 2: bf16 fast path (v6e/v7x MXU) — same kernel, f32 accumulation inside.
    xb = x.astype(jnp.bfloat16)
    w1b, b1b, w2b, b2b = (t.astype(jnp.bfloat16) for t in (w1, b1, w2, b2))
    out_b = jax.block_until_ready(feed_forward(xb, w1b, b1b, w2b, b2b, tile_f=128))
    ref_b = (jnp.maximum(xb.astype(jnp.float32) @ w1b.astype(jnp.float32)
                         + b1b.astype(jnp.float32), 0.0)
             @ w2b.astype(jnp.float32) + b2b.astype(jnp.float32))
    assert out_b.shape == (B, S, d_model)
    assert float(jnp.max(jnp.abs(out_b.astype(jnp.float32) - ref_b))) < 0.1, "bf16 mismatch"

    # Case 3: d_ff not a multiple of the chunk width (ragged reduction chunk + in-kernel
    # masking) and an explicit small row tile so the row axis also has a ragged block.
    d_ff_r = 192
    x3 = jax.random.normal(kx2, (B, S, d_model), jnp.float32)
    w1r, b1r, w2r, b2r = init_params(kp2, d_model, d_ff_r)
    out_r = jax.block_until_ready(
        feed_forward(x3, w1r, b1r, w2r, b2r, tile_m=8, tile_f=128))
    ref_r = jnp.maximum(x3 @ w1r + b1r, 0.0) @ w2r + b2r
    assert jnp.allclose(out_r, ref_r, atol=1e-4, rtol=1e-4), "ragged d_ff mismatch"

    print("KERNEL_OK")
</pallas_src>

<mosaic_0001>
module attributes {stable_mosaic.version = 11 : i64} {
  func.func @ffn_kernel(%arg0: i32, %arg1: i32, %arg2: memref<10x128xf32, #tpu.memory_space<vmem>>, %arg3: memref<128x128xf32, #tpu.memory_space<vmem>>, %arg4: memref<1x128xf32, #tpu.memory_space<vmem>>, %arg5: memref<128x128xf32, #tpu.memory_space<vmem>>, %arg6: memref<1x128xf32, #tpu.memory_space<vmem>>, %arg7: memref<10x128xf32, #tpu.memory_space<vmem>>, %arg8: memref<10x128xf32, #tpu.memory_space<vmem>>) attributes {dimension_semantics = [#tpu.dimension_semantics<parallel>, #tpu.dimension_semantics<arbitrary>], iteration_bounds = array<i64: 1, 2>, scalar_prefetch = 0 : i64, scratch_operands = 1 : i64, tpu.core_type = #tpu.core_type<tc>, window_params = [{transform_indices = @transform_0, window_bounds = array<i64: 10, 128>}, {transform_indices = @transform_1, window_bounds = array<i64: 128, 128>}, {transform_indices = @transform_2, window_bounds = array<i64: 1, 128>}, {transform_indices = @transform_3, window_bounds = array<i64: 128, 128>}, {pipeline_mode = #tpu.pipeline_mode<synchronous>, transform_indices = @transform_4, window_bounds = array<i64: 1, 128>}, {transform_indices = @transform_5, window_bounds = array<i64: 10, 128>}]} {
    %c0_i32 = arith.constant 0 : i32
    %0 = arith.cmpi eq, %arg1, %c0_i32 : i32
    %1 = arith.extui %0 : i1 to i32
    %c0_i32_0 = arith.constant 0 : i32
    %2 = arith.cmpi ne, %1, %c0_i32_0 : i32
    scf.if %2 {
      %cst_15 = arith.constant 0.000000e+00 : f32
      %19 = vector.broadcast %cst_15 : f32 to vector<10x128xf32>
      %c0_16 = arith.constant 0 : index
      %c0_17 = arith.constant 0 : index
      %20 = vector.load %arg8[%c0_16, %c0_17] : memref<10x128xf32, #tpu.memory_space<vmem>>, vector<10x128xf32>
      tpu.vector_store %arg8[%c0_16, %c0_17], %19 {strides = array<i32>} : memref<10x128xf32, #tpu.memory_space<vmem>>, vector<10x128xf32>,
    } else {
    }
    %c0 = arith.constant 0 : index
    %c0_1 = arith.constant 0 : index
    %3 = vector.load %arg2[%c0, %c0_1] : memref<10x128xf32, #tpu.memory_space<vmem>>, vector<10x128xf32>
    %c0_2 = arith.constant 0 : index
    %c0_3 = arith.constant 0 : index
    %4 = vector.load %arg3[%c0_2, %c0_3] : memref<128x128xf32, #tpu.memory_space<vmem>>, vector<128x128xf32>
    %cst = arith.constant dense<0.000000e+00> : vector<10x128xf32>
    %5 = tpu.matmul %3, %4, %cst {dimension_numbers = #tpu.dot_dimension_numbers<[1], [0], [0], [1], [0, 0, 1, 1], [], []>} : vector<10x128xf32>, vector<128x128xf32>, vector<10x128xf32> -> vector<10x128xf32>
    %c0_4 = arith.constant 0 : index
    %c0_5 = arith.constant 0 : index
    %6 = vector.load %arg4[%c0_4, %c0_5] : memref<1x128xf32, #tpu.memory_space<vmem>>, vector<1x128xf32>
    %7 = vector.broadcast %6 : vector<1x128xf32> to vector<10x128xf32>
    %8 = arith.addf %5, %7 : vector<10x128xf32>
    %cst_6 = arith.constant 0.000000e+00 : f32
    %9 = vector.broadcast %cst_6 : f32 to vector<10x128xf32>
    %10 = arith.maximumf %8, %9 : vector<10x128xf32>
    %c0_7 = arith.constant 0 : index
    %c0_8 = arith.constant 0 : index
    %11 = vector.load %arg5[%c0_7, %c0_8] : memref<128x128xf32, #tpu.memory_space<vmem>>, vector<128x128xf32>
    %c0_9 = arith.constant 0 : index
    %c0_10 = arith.constant 0 : index
    %12 = vector.load %arg8[%c0_9, %c0_10] : memref<10x128xf32, #tpu.memory_space<vmem>>, vector<10x128xf32>
    %cst_11 = arith.constant dense<0.000000e+00> : vector<10x128xf32>
    %13 = tpu.matmul %10, %11, %cst_11 {dimension_numbers = #tpu.dot_dimension_numbers<[1], [0], [0], [1], [0, 0, 1, 1], [], []>} : vector<10x128xf32>, vector<128x128xf32>, vector<10x128xf32> -> vector<10x128xf32>
    %14 = arith.addf %12, %13 : vector<10x128xf32>
    %c0_12 = arith.constant 0 : index
    %c0_13 = arith.constant 0 : index
    %15 = vector.load %arg8[%c0_12, %c0_13] : memref<10x128xf32, #tpu.memory_space<vmem>>, vector<10x128xf32>
    tpu.vector_store %arg8[%c0_12, %c0_13], %14 {strides = array<i32>} : memref<10x128xf32, #tpu.memory_space<vmem>>, vector<10x128xf32>,
    %c1_i32 = arith.constant 1 : i32
    %16 = arith.cmpi eq, %arg1, %c1_i32 : i32
    %17 = arith.extui %16 : i1 to i32
    %c0_i32_14 = arith.constant 0 : i32
    %18 = arith.cmpi ne, %17, %c0_i32_14 : i32
    scf.if %18 {
      %c0_15 = arith.constant 0 : index
      %c0_16 = arith.constant 0 : index
      %19 = vector.load %arg8[%c0_15, %c0_16] : memref<10x128xf32, #tpu.memory_space<vmem>>, vector<10x128xf32>
      %c0_17 = arith.constant 0 : index
      %c0_18 = arith.constant 0 : index
      %20 = vector.load %arg6[%c0_17, %c0_18] : memref<1x128xf32, #tpu.memory_space<vmem>>, vector<1x128xf32>
      %21 = vector.broadcast %20 : vector<1x128xf32> to vector<10x128xf32>
      %22 = arith.addf %19, %21 : vector<10x128xf32>
      %c0_19 = arith.constant 0 : index
      %c0_20 = arith.constant 0 : index
      %23 = vector.load %arg7[%c0_19, %c0_20] : memref<10x128xf32, #tpu.memory_space<vmem>>, vector<10x128xf32>
      tpu.vector_store %arg7[%c0_19, %c0_20], %22 {strides = array<i32>} : memref<10x128xf32, #tpu.memory_space<vmem>>, vector<10x128xf32>,
    } else {
    }
    return
  }
  func.func @transform_0(%arg0: i32, %arg1: i32) -> (i32, i32) {
    %c0_i32 = arith.constant 0 : i32
    %c0_i32_0 = arith.constant 0 : i32
    return %arg0, %c0_i32 : i32, i32
  }
  func.func @transform_1(%arg0: i32, %arg1: i32) -> (i32, i32) {
    %c0_i32 = arith.constant 0 : i32
    %c0_i32_0 = arith.constant 0 : i32
    return %c0_i32, %arg1 : i32, i32
  }
  func.func @transform_2(%arg0: i32, %arg1: i32) -> (i32, i32) {
    %c0_i32 = arith.constant 0 : i32
    %c0_i32_0 = arith.constant 0 : i32
    return %c0_i32, %arg1 : i32, i32
  }
  func.func @transform_3(%arg0: i32, %arg1: i32) -> (i32, i32) {
    %c0_i32 = arith.constant 0 : i32
    %c0_i32_0 = arith.constant 0 : i32
    return %arg1, %c0_i32 : i32, i32
  }
  func.func @transform_4(%arg0: i32, %arg1: i32) -> (i32, i32) {
    %c0_i32 = arith.constant 0 : i32
    %c0_i32_0 = arith.constant 0 : i32
    %c0_i32_1 = arith.constant 0 : i32
    return %c0_i32, %c0_i32_0 : i32, i32
  }
  func.func @transform_5(%arg0: i32, %arg1: i32) -> (i32, i32) {
    %c0_i32 = arith.constant 0 : i32
    %c0_i32_0 = arith.constant 0 : i32
    return %arg0, %c0_i32 : i32, i32
  }
}

</mosaic_0001>

<llo_original>
// kernel: tpu_custom_call.1
$region0: #{tpu_custom_call.1}
  #allocation0 [shape = 'u32[]', space=smem, size = 0x4, offset = 0x4, fixed_abs, tag = 'smem constant byte address 0x4 - core index']
  #allocation1 [shape = 'u32[72,128]{1,0:T(1,128)}', space=vmem, size = 0x9000, scoped, tag = 'internal scratch']
  #allocation2 [shape = 'f32[10,128]{1,0:T(8,128)}', space=vmem, size = 0x2000, scoped, tag = 'scratch operand']
  %s0 = inlined_call_operand.hbm [shape: f32[10,128], index: 0, kind: input, shape index: {}]
  %s1 = inlined_call_operand.hbm [shape: f32[128,256], index: 1, kind: input, shape index: {}]
  %s2 = inlined_call_operand.hbm [shape: f32[1,256], index: 2, kind: input, shape index: {}]
  %s3 = inlined_call_operand.hbm [shape: f32[256,128], index: 3, kind: input, shape index: {}]
  %s4 = inlined_call_operand.vmem [shape: f32[1,128], index: 4, kind: input, shape index: {}]
  %s5 = inlined_call_operand.hbm [shape: f32[10,128], index: 5, kind: output, shape index: {}]
  %s6 = sld [smem:[#allocation0]]
  $region77: #{tpu_custom_call.1} parent=0
    _
  %s8 = ssub.s32 1, %s6
  %s9 = scalar_select 0, %s8, %s6
  $region1: #{tpu_custom_call.1} parent=0
    #allocation3 [shape = 'u8[8192]{0}', space=vmem, size = 0x2000, scoped, tag = 'input window, operand 0, single buffered']
    #allocation4 [shape = 's32[2]{0}', space=sflag, size = 0x8, scoped, tag = 'scoped memory for tpu_custom_call.1']
    #allocation5 [shape = 's32[2]{0}', space=sflag, size = 0x8, scoped, tag = 'scoped memory for tpu_custom_call.1']
    #allocation6 [shape = 'u8[131072]{0}', space=vmem, size = 0x20000, scoped, tag = 'input window, operand 1']
    #allocation7 [shape = 's32[2]{0}', space=sflag, size = 0x8, scoped, tag = 'scoped memory for tpu_custom_call.1']
    #allocation8 [shape = 'u8[1024]{0}', space=vmem, size = 0x400, scoped, tag = 'input window, operand 2']
    #allocation9 [shape = 'u8[131072]{0}', space=vmem, size = 0x20000, scoped, tag = 'input window, operand 3']
    #allocation10 [shape = 's32[2]{0}', space=sflag, size = 0x8, scoped, tag = 'scoped memory for tpu_custom_call.1']
    #allocation11 [shape = 'u8[8192]{0}', space=vmem, size = 0x2000, scoped, tag = 'output window, operand 0, single buffered']
    %10 = vsyncpa [#allocation4], 0
    %11 = vsyncpa [#allocation7], 0
    %s12 = scalar_lea.sflag [#allocation7], 1
    %13 = vsyncpa %s12, 0
    %14 = vsyncpa [#allocation10], 0
    %s15 = scalar_lea.sflag [#allocation10], 1
    %16 = vsyncpa %s15, 0
    %17 = vsyncpa [#allocation5], 0
    loop: start=0, step=1, limit=4
    $region2: #{tpu_custom_call.1} parent=1 // loop_pre_header
      _
    $region3: #{tpu_custom_call.1} parent=1 // loop_header
      %s19 = sphi 0, %s23
      %p20 = scmp.ge.s32.totalorder %s19, 4
      %s26 = sphi 0, %s38
      %s27 = sphi 0, %s34
      %s28 = sphi 0, %s26
      %s29 = sphi 0, %s27
      %s30 = sphi 0, %s28
      %s31 = sphi 0, %s29
      %s41 = sphi 0, %s43
      %s44 = sphi 0, %s41
      %s45 = sphi 0, %s44
      %s61 = sphi 0, %s45
      %s67 = sphi 0, %s69
      %s70 = sphi 0, %s67
      %s71 = sphi 0, %s70
      %s87 = sphi 0, %s71
      %s93 = sphi 0, %s95
      %s96 = sphi 0, %s93
      %s97 = sphi 0, %s96
      %s113 = sphi 0, %s97
      %s119 = sphi 0, %s121
      %s122 = sphi 0, %s119
      %s123 = sphi 0, %s122
      %s139 = sphi 0, %s123
      %s143 = sphi 0, %s143
      %s145 = sphi 0, %s143
      %s146 = sphi 0, %s145
      %s160 = sphi 0, %s146
      %s166 = sphi 0, %s168
      %s169 = sphi 0, %s166
      %s170 = sphi 0, %s169
      %s186 = sphi 0, %s170
    $region4: #{tpu_custom_call.1} parent=1 // loop_header_branch
      %22 = sbr.rel (%p20) target = $region8
    $region5: #{tpu_custom_call.1} parent=1 // loop_body
      %s24 = ssub.s32 %s19, 1
      %s25 = ssub.s32 %s19, 2
      %s32 = sadd.s32 1, %s27
      %p33 = scmp.ge.s32.totalorder %s32, 2
      %s34 = scalar_select %p33, 0, %s32
      %s35 = sadd.s32 1, %s26
      %s36 = scalar_select %p33, %s35, %s26
      %p37 = scmp.ge.s32.totalorder %s36, 1
      %s38 = scalar_select %p37, 0, %s36
      %s39 = ssub.s32 %s26, %s38
      %p40 = scmp.eq.s32.totalorder %s39, 0
      %s42 = sadd.s32 %s41, 1
      %s43 = scalar_select %p40, %s41, %s42
      %p46 = pneg %p40
      %p47 = scmp.eq.s32.totalorder %s19, 1
      %p48 = por %p46, %p47
      %p49 = scmp.ne.s32.totalorder %s41, %s44
      %p50 = scmp.eq.s32.totalorder %s19, 0
      %p51 = por %p49, %p50
      %p52 = scmp.ne.s32.totalorder %s41, %s44
      %p53 = scmp.eq.s32.totalorder %s24, 1
      %p54 = por %p52, %p53
      %p55 = scmp.ne.s32.totalorder %s44, %s45
      %p56 = scmp.eq.s32.totalorder %s24, 0
      %p57 = por %p55, %p56
      %p58 = scmp.ne.s32.totalorder %s44, %s45
      %p59 = scmp.eq.s32.totalorder %s25, 1
      %p60 = por %p58, %p59
      %p62 = scmp.ne.s32.totalorder %s45, %s61
      %p63 = scmp.eq.s32.totalorder %s25, 0
      %p64 = por %p62, %p63
      %s65 = ssub.s32 %s27, %s34
      %p66 = scmp.eq.s32.totalorder %s65, 0
      %s68 = sadd.s32 %s67, 1
      %s69 = scalar_select %p66, %s67, %s68
      %p72 = pneg %p66
      %p73 = scmp.eq.s32.totalorder %s19, 1
      %p74 = por %p72, %p73
      %p75 = scmp.ne.s32.totalorder %s67, %s70
      %p76 = scmp.eq.s32.totalorder %s19, 0
      %p77 = por %p75, %p76
      %p78 = scmp.ne.s32.totalorder %s67, %s70
      %p79 = scmp.eq.s32.totalorder %s24, 1
      %p80 = por %p78, %p79
      %p81 = scmp.ne.s32.totalorder %s70, %s71
      %p82 = scmp.eq.s32.totalorder %s24, 0
      %p83 = por %p81, %p82
      %p84 = scmp.ne.s32.totalorder %s70, %s71
      %p85 = scmp.eq.s32.totalorder %s25, 1
      %p86 = por %p84, %p85
      %p88 = scmp.ne.s32.totalorder %s71, %s87
      %p89 = scmp.eq.s32.totalorder %s25, 0
      %p90 = por %p88, %p89
      %s91 = ssub.s32 %s27, %s34
      %p92 = scmp.eq.s32.totalorder %s91, 0
      %s94 = sadd.s32 %s93, 1
      %s95 = scalar_select %p92, %s93, %s94
      %p98 = pneg %p92
      %p99 = scmp.eq.s32.totalorder %s19, 1
      %p100 = por %p98, %p99
      %p101 = scmp.ne.s32.totalorder %s93, %s96
      %p102 = scmp.eq.s32.totalorder %s19, 0
      %p103 = por %p101, %p102
      %p104 = scmp.ne.s32.totalorder %s93, %s96
      %p105 = scmp.eq.s32.totalorder %s24, 1
      %p106 = por %p104, %p105
      %p107 = scmp.ne.s32.totalorder %s96, %s97
      %p108 = scmp.eq.s32.totalorder %s24, 0
      %p109 = por %p107, %p108
      %p110 = scmp.ne.s32.totalorder %s96, %s97
      %p111 = scmp.eq.s32.totalorder %s25, 1
      %p112 = por %p110, %p111
      %p114 = scmp.ne.s32.totalorder %s97, %s113
      %p115 = scmp.eq.s32.totalorder %s25, 0
      %p116 = por %p114, %p115
      %s117 = ssub.s32 %s27, %s34
      %p118 = scmp.eq.s32.totalorder %s117, 0
      %s120 = sadd.s32 %s119, 1
      %s121 = scalar_select %p118, %s119, %s120
      %p124 = pneg %p118
      %p125 = scmp.eq.s32.totalorder %s19, 1
      %p126 = por %p124, %p125
      %p127 = scmp.ne.s32.totalorder %s119, %s122
      %p128 = scmp.eq.s32.totalorder %s19, 0
      %p129 = por %p127, %p128
      %p130 = scmp.ne.s32.totalorder %s119, %s122
      %p131 = scmp.eq.s32.totalorder %s24, 1
      %p132 = por %p130, %p131
      %p133 = scmp.ne.s32.totalorder %s122, %s123
      %p134 = scmp.eq.s32.totalorder %s24, 0
      %p135 = por %p133, %p134
      %p136 = scmp.ne.s32.totalorder %s122, %s123
      %p137 = scmp.eq.s32.totalorder %s25, 1
      %p138 = por %p136, %p137
      %p140 = scmp.ne.s32.totalorder %s123, %s139
      %p141 = scmp.eq.s32.totalorder %s25, 0
      %p142 = por %p140, %p141
      %s144 = sadd.s32 %s143, 1
      %p147 = scmp.eq.s32.totalorder %s19, 1
      %p148 = scmp.ne.s32.totalorder %s143, %s145
      %p149 = scmp.eq.s32.totalorder %s19, 0
      %p150 = por %p148, %p149
      %p151 = scmp.ne.s32.totalorder %s143, %s145
      %p152 = scmp.eq.s32.totalorder %s24, 1
      %p153 = por %p151, %p152
      %p154 = scmp.ne.s32.totalorder %s145, %s146
      %p155 = scmp.eq.s32.totalorder %s24, 0
      %p156 = por %p154, %p155
      %p157 = scmp.ne.s32.totalorder %s145, %s146
      %p158 = scmp.eq.s32.totalorder %s25, 1
      %p159 = por %p157, %p158
      %p161 = scmp.ne.s32.totalorder %s146, %s160
      %p162 = scmp.eq.s32.totalorder %s25, 0
      %p163 = por %p161, %p162
      %s164 = ssub.s32 %s26, %s38
      %p165 = scmp.eq.s32.totalorder %s164, 0
      %s167 = sadd.s32 %s166, 1
      %s168 = scalar_select %p165, %s166, %s167
      %p171 = pneg %p165
      %p172 = scmp.eq.s32.totalorder %s19, 1
      %p173 = por %p171, %p172
      %p174 = scmp.ne.s32.totalorder %s166, %s169
      %p175 = scmp.eq.s32.totalorder %s19, 0
      %p176 = por %p174, %p175
      %p177 = scmp.ne.s32.totalorder %s166, %s169
      %p178 = scmp.eq.s32.totalorder %s24, 1
      %p179 = por %p177, %p178
      %p180 = scmp.ne.s32.totalorder %s169, %s170
      %p181 = scmp.eq.s32.totalorder %s24, 0
      %p182 = por %p180, %p181
      %p183 = scmp.ne.s32.totalorder %s169, %s170
      %p184 = scmp.eq.s32.totalorder %s25, 1
      %p185 = por %p183, %p184
      %p187 = scmp.ne.s32.totalorder %s170, %s186
      %p188 = scmp.eq.s32.totalorder %s25, 0
      %p189 = por %p187, %p188
      %p190 = scmp.le.s32.totalorder 1, %s19
      %p191 = scmp.lt.s32.totalorder %s19, 3
      %p192 = pnand %p190, %p191
      %p193 = pneg %p192
      // Predicated region
      $region9: #{tpu_custom_call.1} parent=5 // pred_check
        _
      $region10: #{tpu_custom_call.1} parent=5 // pred_check_branch
        %195 = sbr.rel (%p192) target = $region12
      $region11: #{tpu_custom_call.1} parent=5 // pred_region
        %s196 = ssub.s32 %s19, 1
        // Predicated region
        $region13: #{tpu_custom_call.1} parent=11 // pred_check
          %p197 = pneg %p57
        $region14: #{tpu_custom_call.1} parent=11 // pred_check_branch
          %199 = sbr.rel (%p197) target = $region16
        $region15: #{tpu_custom_call.1} parent=11 // pred_region
          %s200 = smul.u32 2, %s28
          %202 = vsyncadd [#allocation4], 0
          %s203 = smul.addr %s200, 8
          %s204 = scalar_lea.hbm %s0, %s203
          %s205 = sshll.u32 %s204, 4
          %s206 = int_to_ptr.hbm [resolvable:$true] %s205
          %s207 = sshll.u32 [#allocation3], 4
          %s208 = int_to_ptr.vmem [resolvable:$true] %s207
          %213 = dma.hbm_to_vmem [thread:$0]  %s206, 256, %s208, [#allocation4], 128, 128, 8
        $region16: #{tpu_custom_call.1} parent=11 // pred_fallthru
          _
        // Predicated region
        $region17: #{tpu_custom_call.1} parent=11 // pred_check
          %p214 = pneg %p156
        $region18: #{tpu_custom_call.1} parent=11 // pred_check_branch
          %216 = sbr.rel (%p214) target = $region20
        $region19: #{tpu_custom_call.1} parent=11 // pred_region
          _
        $region20: #{tpu_custom_call.1} parent=11 // pred_fallthru
          _
      $region12: #{tpu_custom_call.1} parent=5 // pred_fallthru
        _
      %p217 = scmp.lt.s32.totalorder %s19, 2
      // Predicated region
      $region21: #{tpu_custom_call.1} parent=5 // pred_check
        %p218 = pneg %p217
      $region22: #{tpu_custom_call.1} parent=5 // pred_check_branch
        %220 = sbr.rel (%p218) target = $region24
      $region23: #{tpu_custom_call.1} parent=5 // pred_region
        // Predicated region
        $region25: #{tpu_custom_call.1} parent=23 // pred_check
          %p221 = pneg %p77
        $region26: #{tpu_custom_call.1} parent=23 // pred_check_branch
          %223 = sbr.rel (%p221) target = $region28
        $region27: #{tpu_custom_call.1} parent=23 // pred_region
          %s224 = sand.u32 %s19, 1
          %s225 = scalar_lea.sflag [#allocation7], %s224
          %s226 = sand.u32 %s67, 1
          %s227 = smul.addr %s226, 128
          %s228 = scalar_lea.vmem [#allocation6], %s227
          %230 = vsyncadd %s225, 0
          %s231 = smul.addr %s27, 8
          %s232 = scalar_lea.hbm %s1, %s231
          %s233 = sshll.u32 %s232, 4
          %s234 = int_to_ptr.hbm [resolvable:$true] %s233
          %s235 = sshll.u32 %s228, 4
          %s236 = int_to_ptr.vmem [resolvable:$true] %s235
          %241 = dma.hbm_to_vmem [thread:$0]  %s234, 2048, %s236, %s225, 256, 128, 8
        $region28: #{tpu_custom_call.1} parent=23 // pred_fallthru
          _
        // Predicated region
        $region29: #{tpu_custom_call.1} parent=23 // pred_check
          %p242 = pneg %p103
        $region30: #{tpu_custom_call.1} parent=23 // pred_check_branch
          %244 = sbr.rel (%p242) target = $region32
        $region31: #{tpu_custom_call.1} parent=23 // pred_region
          %s245 = sand.u32 %s19, 1
          %s246 = scalar_lea.sflag [#allocation7], %s245
          %s247 = sand.u32 %s93, 1
          %s248 = scalar_lea.vmem [#allocation8], %s247
          %250 = vsyncadd %s246, 0
          %s251 = scalar_lea.hbm %s2, %s27
          %s253 = sshll.u32 %s251, 4
          %s254 = int_to_ptr.hbm [resolvable:$true] %s253
          %s255 = sshll.u32 %s248, 4
          %s256 = int_to_ptr.vmem [resolvable:$true] %s255
          %258 = dma.hbm_to_vmem [thread:$0]  %s254, 16, %s256, %s246
        $region32: #{tpu_custom_call.1} parent=23 // pred_fallthru
          _
        // Predicated region
        $region33: #{tpu_custom_call.1} parent=23 // pred_check
          %p259 = pneg %p129
        $region34: #{tpu_custom_call.1} parent=23 // pred_check_branch
          %261 = sbr.rel (%p259) target = $region36
        $region35: #{tpu_custom_call.1} parent=23 // pred_region
          %s262 = sand.u32 %s119, 1
          %s263 = scalar_lea.sflag [#allocation10], %s262
          %s264 = sand.u32 %s119, 1
          %s265 = smul.addr %s264, 128
          %s266 = scalar_lea.vmem [#allocation9], %s265
          %s267 = smul.u32 16, %s27
          %269 = vsyncadd %s263, 0
          %s270 = smul.addr %s267, 8
          %s271 = scalar_lea.hbm %s3, %s270
          %s272 = sshll.u32 %s271, 4
          %s273 = int_to_ptr.hbm [resolvable:$true] %s272
          %s274 = sshll.u32 %s266, 4
          %s275 = int_to_ptr.vmem [resolvable:$true] %s274
          %280 = dma.hbm_to_vmem [thread:$0]  %s273, 2048, %s275, %s263, 128, 128, 8
        $region36: #{tpu_custom_call.1} parent=23 // pred_fallthru
          _
      $region24: #{tpu_custom_call.1} parent=5 // pred_fallthru
        _
      %p281 = scmp.le.s32.totalorder 1, %s19
      %p282 = scmp.lt.s32.totalorder %s19, 3
      %p283 = pnand %p281, %p282
      %p284 = pneg %p283
      // Predicated region
      $region37: #{tpu_custom_call.1} parent=5 // pred_check
        _
      $region38: #{tpu_custom_call.1} parent=5 // pred_check_branch
        %286 = sbr.rel (%p283) target = $region40
      $region39: #{tpu_custom_call.1} parent=5 // pred_region
        %s287 = ssub.s32 %s19, 1
        // Predicated region
        $region41: #{tpu_custom_call.1} parent=39 // pred_check
          %p288 = pneg %p57
        $region42: #{tpu_custom_call.1} parent=39 // pred_check_branch
          %290 = sbr.rel (%p288) target = $region44
        $region43: #{tpu_custom_call.1} parent=39 // pred_region
          %292 = dma.done [#allocation4], 256
        $region44: #{tpu_custom_call.1} parent=39 // pred_fallthru
          _
        %s293 = sand.u32 %s24, 1
        %s294 = scalar_lea.sflag [#allocation7], %s293
        %s295 = sand.u32 %s70, 1
        %s296 = smul.addr %s295, 128
        %s297 = scalar_lea.vmem [#allocation6], %s296
        // Predicated region
        $region45: #{tpu_custom_call.1} parent=39 // pred_check
          %p298 = pneg %p83
        $region46: #{tpu_custom_call.1} parent=39 // pred_check_branch
          %300 = sbr.rel (%p298) target = $region48
        $region47: #{tpu_custom_call.1} parent=39 // pred_region
          %302 = dma.done %s294, 2048
        $region48: #{tpu_custom_call.1} parent=39 // pred_fallthru
          _
        %s303 = sand.u32 %s24, 1
        %s304 = scalar_lea.sflag [#allocation7], %s303
        %s305 = sand.u32 %s96, 1
        %s306 = scalar_lea.vmem [#allocation8], %s305
        // Predicated region
        $region49: #{tpu_custom_call.1} parent=39 // pred_check
          %p307 = pneg %p109
        $region50: #{tpu_custom_call.1} parent=39 // pred_check_branch
          %309 = sbr.rel (%p307) target = $region52
        $region51: #{tpu_custom_call.1} parent=39 // pred_region
          %311 = dma.done %s304, 16
        $region52: #{tpu_custom_call.1} parent=39 // pred_fallthru
          _
        %s312 = sand.u32 %s122, 1
        %s313 = scalar_lea.sflag [#allocation10], %s312
        %s314 = sand.u32 %s122, 1
        %s315 = smul.addr %s314, 128
        %s316 = scalar_lea.vmem [#allocation9], %s315
        // Predicated region
        $region53: #{tpu_custom_call.1} parent=39 // pred_check
          %p317 = pneg %p135
        $region54: #{tpu_custom_call.1} parent=39 // pred_check_branch
          %319 = sbr.rel (%p317) target = $region56
        $region55: #{tpu_custom_call.1} parent=39 // pred_region
          %321 = dma.done %s313, 2048
        $region56: #{tpu_custom_call.1} parent=39 // pred_fallthru
          _
        %p322 = pneg %p57
        %p323 = pneg %p54
        %s324 = sand.u32 %s24, 1
        %s325 = scalar_lea.sflag [#allocation7], %s324
        %s326 = sand.u32 %s70, 1
        %s327 = smul.addr %s326, 128
        %s328 = scalar_lea.vmem [#allocation6], %s327
        %p329 = pneg %p83
        %p330 = pneg %p80
        %s331 = sand.u32 %s24, 1
        %s332 = scalar_lea.sflag [#allocation7], %s331
        %s333 = sand.u32 %s96, 1
        %s334 = scalar_lea.vmem [#allocation8], %s333
        %p335 = pneg %p109
        %p336 = pneg %p106
        %s337 = sand.u32 %s122, 1
        %s338 = scalar_lea.sflag [#allocation10], %s337
        %s339 = sand.u32 %s122, 1
        %s340 = smul.addr %s339, 128
        %s341 = scalar_lea.vmem [#allocation9], %s340
        %p342 = pneg %p135
        %p343 = pneg %p132
        %p344 = pneg %p156
        %p345 = pneg %p153
        %p346 = pneg %p182
        %p347 = pneg %p179
        %s348 = smul.u32 2, %s28
        %s349 = smul.u32 16, %s29
        %s350 = smul.u32 2, %s28
        %p351 = scmp.eq.s32.totalorder %s29, 0
        // Predicated region
        $region57: #{tpu_custom_call.1} parent=39 // pred_check
          %p352 = pneg %p351
        $region58: #{tpu_custom_call.1} parent=39 // pred_check_branch
          %354 = sbr.rel (%p352) target = $region60
        $region59: #{tpu_custom_call.1} parent=39 // pred_region
          %355 = vst [vmem:[#allocation2] sm:$0xff] 0.0
          %356 = vst [vmem:[#allocation2 + $0x8] sm:$0x3] 0.0
        $region60: #{tpu_custom_call.1} parent=39 // pred_fallthru
          _
        %v357 = vld [vmem:[#allocation3] sm:$0xff]
        %v358 = vld [vmem:[#allocation3 + $0x8] sm:$0x3]
        %v359 = vld [vmem:[%s297] sm:$0xff]
        %v360 = vld [vmem:[%s297 + $0x8] sm:$0xff]
        %v361 = vld [vmem:[%s297 + $0x10] sm:$0xff]
        %v362 = vld [vmem:[%s297 + $0x18] sm:$0xff]
        %v363 = vld [vmem:[%s297 + $0x20] sm:$0xff]
        %v364 = vld [vmem:[%s297 + $0x28] sm:$0xff]
        %v365 = vld [vmem:[%s297 + $0x30] sm:$0xff]
        %v366 = vld [vmem:[%s297 + $0x38] sm:$0xff]
        %v367 = vld [vmem:[%s297 + $0x40] sm:$0xff]
        %v368 = vld [vmem:[%s297 + $0x48] sm:$0xff]
        %v369 = vld [vmem:[%s297 + $0x50] sm:$0xff]
        %v370 = vld [vmem:[%s297 + $0x58] sm:$0xff]
        %v371 = vld [vmem:[%s297 + $0x60] sm:$0xff]
        %v372 = vld [vmem:[%s297 + $0x68] sm:$0xff]
        %v373 = vld [vmem:[%s297 + $0x70] sm:$0xff]
        %v374 = vld [vmem:[%s297 + $0x78] sm:$0xff]
        %v375 = vld [vmem:[%s306] sm:$0x1]
        %v377 = vperm.slane %v375, 0
        %379 = vmatpush.msra.mxu0 %v374
        %380 = vmatpush.msra.mxu0 %v373
        %381 = vmatpush.msra.mxu0 %v372
        %382 = vmatpush.msra.mxu0 %v371
        %383 = vmatpush.msra.mxu0 %v370
        %384 = vmatpush.msra.mxu0 %v369
        %385 = vmatpush.msra.mxu0 %v368
        %386 = vmatpush.msra.mxu0 %v367
        %387 = vmatpush.msra.mxu0 %v366
        %388 = vmatpush.msra.mxu0 %v365
        %389 = vmatpush.msra.mxu0 %v364
        %390 = vmatpush.msra.mxu0 %v363
        %391 = vmatpush.msra.mxu0 %v362
        %392 = vmatpush.msra.mxu0 %v361
        %393 = vmatpush.msra.mxu0 %v360
        %394 = vmatpush.msra.mxu0 %v359
        %395 = vmatmul.f32.gmra.mxu0 %v357
        %v396 = vpop.f32.mrf.mxu0
        %v397 = vadd.f32 %v377, %v396
        %398 = vmatmul.f32.gmra.mxu0 %v358
        %v399 = vpop.f32.mrf.mxu0
        %v400 = vadd.f32 %v377, %v399
        %401 = vdwg.mxu0
        %v402 = vmax.f32 %v397, 0.0
        %v403 = vmax.f32 %v400, 0.0
        %v404 = vld [vmem:[%s316] sm:$0xff]
        %v405 = vld [vmem:[%s316 + $0x8] sm:$0xff]
        %v406 = vld [vmem:[%s316 + $0x10] sm:$0xff]
        %v407 = vld [vmem:[%s316 + $0x18] sm:$0xff]
        %v408 = vld [vmem:[%s316 + $0x20] sm:$0xff]
        %v409 = vld [vmem:[%s316 + $0x28] sm:$0xff]
        %v410 = vld [vmem:[%s316 + $0x30] sm:$0xff]
        %v411 = vld [vmem:[%s316 + $0x38] sm:$0xff]
        %v412 = vld [vmem:[%s316 + $0x40] sm:$0xff]
        %v413 = vld [vmem:[%s316 + $0x48] sm:$0xff]
        %v414 = vld [vmem:[%s316 + $0x50] sm:$0xff]
        %v415 = vld [vmem:[%s316 + $0x58] sm:$0xff]
        %v416 = vld [vmem:[%s316 + $0x60] sm:$0xff]
        %v417 = vld [vmem:[%s316 + $0x68] sm:$0xff]
        %v418 = vld [vmem:[%s316 + $0x70] sm:$0xff]
        %v419 = vld [vmem:[%s316 + $0x78] sm:$0xff]
        %v420 = vld [vmem:[#allocation2] sm:$0xff]
        %v421 = vld [vmem:[#allocation2 + $0x8] sm:$0x3]
        %422 = vmatpush.msra.mxu0 %v419
        %423 = vmatpush.msra.mxu0 %v418
        %424 = vmatpush.msra.mxu0 %v417
        %425 = vmatpush.msra.mxu0 %v416
        %426 = vmatpush.msra.mxu0 %v415
        %427 = vmatpush.msra.mxu0 %v414
        %428 = vmatpush.msra.mxu0 %v413
        %429 = vmatpush.msra.mxu0 %v412
        %430 = vmatpush.msra.mxu0 %v411
        %431 = vmatpush.msra.mxu0 %v410
        %432 = vmatpush.msra.mxu0 %v409
        %433 = vmatpush.msra.mxu0 %v408
        %434 = vmatpush.msra.mxu0 %v407
        %435 = vmatpush.msra.mxu0 %v406
        %436 = vmatpush.msra.mxu0 %v405
        %437 = vmatpush.msra.mxu0 %v404
        %438 = vmatmul.f32.gmra.mxu0 %v402
        %v439 = vpop.f32.mrf.mxu0
        %v440 = vadd.f32 0.0, %v439
        %441 = vmatmul.f32.gmra.mxu0 %v403
        %v442 = vpop.f32.mrf.mxu0
        %v443 = vadd.f32 0.0, %v442
        %444 = vdwg.mxu0
        %v445 = vadd.f32 %v420, %v440
        %v446 = vadd.f32 %v421, %v443
        %447 = vst [vmem:[#allocation2] sm:$0xff] %v445
        %448 = vst [vmem:[#allocation2 + $0x8] sm:$0x3] %v446
        %p449 = scmp.eq.s32.totalorder %s29, 1
        // Predicated region
        $region61: #{tpu_custom_call.1} parent=39 // pred_check
          %p450 = pneg %p449
        $region62: #{tpu_custom_call.1} parent=39 // pred_check_branch
          %452 = sbr.rel (%p450) target = $region64
        $region63: #{tpu_custom_call.1} parent=39 // pred_region
          %v453 = vld [vmem:[#allocation2] sm:$0xff]
          %v454 = vld [vmem:[#allocation2 + $0x8] sm:$0x3]
          %v455 = vld [vmem:[%s4] sm:$0x1]
          %v457 = vperm.slane %v455, 0
          %v459 = vadd.f32 %v453, %v457
          %v460 = vadd.f32 %v454, %v457
          %461 = vst [vmem:[#allocation11] sm:$0xff] %v459
          %462 = vst [vmem:[#allocation11 + $0x8] sm:$0x3] %v460
        $region64: #{tpu_custom_call.1} parent=39 // pred_fallthru
          _
        // Predicated region
        $region65: #{tpu_custom_call.1} parent=39 // pred_check
          %p463 = pneg %p179
        $region66: #{tpu_custom_call.1} parent=39 // pred_check_branch
          %465 = sbr.rel (%p463) target = $region68
        $region67: #{tpu_custom_call.1} parent=39 // pred_region
          %s466 = smul.u32 2, %s28
          %468 = vsyncadd [#allocation5], 0
          %s469 = smul.addr %s466, 8
          %s470 = scalar_lea.hbm %s5, %s469
          %s471 = sshll.u32 [#allocation11], 4
          %s472 = int_to_ptr.vmem [resolvable:$true] %s471
          %s473 = sshll.u32 %s470, 4
          %s474 = int_to_ptr.hbm [resolvable:$true] %s473
          %479 = dma.vmem_to_hbm [thread:$0]  %s472, 256, %s474, [#allocation5], 128, 128, 8
        $region68: #{tpu_custom_call.1} parent=39 // pred_fallthru
          _
        // Predicated region
        $region69: #{tpu_custom_call.1} parent=39 // pred_check
          %p480 = pneg %p179
        $region70: #{tpu_custom_call.1} parent=39 // pred_check_branch
          %482 = sbr.rel (%p480) target = $region72
        $region71: #{tpu_custom_call.1} parent=39 // pred_region
          %484 = dma.done [#allocation5], 256
        $region72: #{tpu_custom_call.1} parent=39 // pred_fallthru
          _
      $region40: #{tpu_custom_call.1} parent=5 // pred_fallthru
        _
      %p485 = scmp.le.s32.totalorder 2, %s19
      // Predicated region
      $region73: #{tpu_custom_call.1} parent=5 // pred_check
        %p486 = pneg %p485
      $region74: #{tpu_custom_call.1} parent=5 // pred_check_branch
        %488 = sbr.rel (%p486) target = $region76
      $region75: #{tpu_custom_call.1} parent=5 // pred_region
        %s489 = ssub.s32 %s19, 2
      $region76: #{tpu_custom_call.1} parent=5 // pred_fallthru
        _
    $region6: #{tpu_custom_call.1} parent=1 // loop_footer
      %s23 = sadd.s32 1, %s19
    $region7: #{tpu_custom_call.1} parent=1 // loop_footer_branch
      %18 = sbr.rel target = $region3
    $region8: #{tpu_custom_call.1} parent=1 // loop_exit
      _
    %490 = vsyncpa [#allocation4], 1
    %s491 = scalar_lea.sflag [#allocation4], 1
    %492 = vsyncpa %s491, 1
    %493 = vsyncpa [#allocation7], 1
    %s494 = scalar_lea.sflag [#allocation7], 1
    %495 = vsyncpa %s494, 1
    %496 = vsyncpa [#allocation10], 1
    %s497 = scalar_lea.sflag [#allocation10], 1
    %498 = vsyncpa %s497, 1
    %499 = vsyncpa [#allocation5], 1
    %s500 = scalar_lea.sflag [#allocation5], 1
    %501 = vsyncpa %s500, 1

</llo_original>
